<compile_context>
chip_gen: v5e
topology: v5e:2x2
jax: 0.10.0
libtpu: 0.0.40
codegen_flags: <defaults>
</compile_context>

<pallas_src>
import functools
import math

import jax
import jax.numpy as jnp
from jax.experimental import pallas as pl
from jax.experimental.pallas import tpu as pltpu

_EPS = 1e-5
_LANE = 128


# ----------------------------------------------------------------------------
# Kernels
# ----------------------------------------------------------------------------
def _layernorm_kernel(x_ref, scale_ref, shift_ref, o_ref, *, eps):
    """Standard path: normalize over the lane axis (used when d_emb >= 128)."""
    x = x_ref[...].astype(jnp.float32)
    inv_d = 1.0 / x.shape[-1]
    mean = jnp.sum(x, axis=-1, keepdims=True) * inv_d
    centered = x - mean
    var = jnp.sum(centered * centered, axis=-1, keepdims=True) * inv_d  # unbiased=False
    inv_std = jax.lax.rsqrt(var + eps)
    out = (centered * inv_std) * scale_ref[...].astype(jnp.float32) \
          + shift_ref[...].astype(jnp.float32)
    o_ref[...] = out.astype(o_ref.dtype)


def _group_sum(v, gmat_bf16, *, skip_lo):
    """Per-lane-group sum (broadcast back to every lane of its group) via a
    block-diagonal 0/1 matmul on the MXU.  Operands are explicitly bf16 so
    each dot lowers to exactly one bf16 MXU pass; `v` is split into a
    bf16-exact 'hi' part plus a small residual so the result stays f32
    accurate.  When the input dtype is bf16, hi == v exactly and the lo pass
    is skipped (skip_lo=True)."""
    hi = v.astype(jnp.bfloat16)
    acc = jnp.dot(hi, gmat_bf16, preferred_element_type=jnp.float32)
    if not skip_lo:
        lo = (v - hi.astype(jnp.float32)).astype(jnp.bfloat16)
        acc = acc + jnp.dot(lo, gmat_bf16, preferred_element_type=jnp.float32)
    return acc


def _layernorm_packed_kernel(x_ref, gmat_ref, scale_ref, shift_ref, o_ref, *,
                             d_emb, eps, skip_lo):
    """Lane-dense path for d_emb < 128: each VMEM row holds g = 128 // d_pad
    original rows packed along the 128-wide lane axis (d_pad = next pow2 >=
    d_emb; pad lanes are masked out of gmat).  Reductions go through a
    (128, 128) block-diagonal 0/1 bf16 matmul (MXU), which also broadcasts the
    per-row statistics back to every lane of the row's group."""
    x = x_ref[...].astype(jnp.float32)
    gmat = gmat_ref[...]                     # bf16 block-diag, pad lanes zeroed
    inv_d = 1.0 / d_emb
    mean = _group_sum(x, gmat, skip_lo=skip_lo) * inv_d
    centered = x - mean
    var = _group_sum(centered * centered, gmat, skip_lo=skip_lo) * inv_d
    inv_std = jax.lax.rsqrt(var + eps)
    out = (centered * inv_std) * scale_ref[...].astype(jnp.float32) \
          + shift_ref[...].astype(jnp.float32)
    o_ref[...] = out.astype(o_ref.dtype)


# ----------------------------------------------------------------------------
# Tiling helpers
# ----------------------------------------------------------------------------
def _vmem_budgets():
    """(tile budget, vmem_limit_bytes) — generation aware.

    128-MiB parts (v5e/v6e) get a ~64 MiB tile budget and a 96 MiB scoped
    limit; v7x (64 MiB physical) — or unknown hardware — gets the conservative
    40 / 56 MiB pair so 2x-in + 2x-out double buffers plus block-sized f32
    temporaries stay inside physical VMEM."""
    try:
        cap = getattr(pltpu.get_tpu_info(), "vmem_capacity_bytes", None)
    except Exception:  # e.g. not on a TPU backend at trace time
        cap = None
    if cap is not None and cap >= (96 << 20):
        return 64 << 20, 96 << 20
    return 40 << 20, 56 << 20


def _pick_block_rows(num_rows, lane_width, in_itemsize, out_itemsize,
                     budget_bytes, max_block_rows=4096):
    """Largest row tile (multiple of 16) whose VMEM footprint fits the budget.

    Per-row VMEM: double-buffered input + double-buffered output + ~3
    block-sized f32 temporaries while computing.  The 4096-row cap keeps
    per-step HBM traffic at >=4 MiB for narrow (128-lane) rows so the ~0.35 us
    per-grid-step overhead stays well under the DMA time even on v7x."""
    bytes_per_row = lane_width * (2 * in_itemsize + 2 * out_itemsize + 3 * 4)
    target = budget_bytes // max(bytes_per_row, 1)
    target = min(int(target), max_block_rows)
    target = max(16, (target // 16) * 16)        # multiple of 16: f32 & packed bf16 tiles
    rows_rounded = ((num_rows + 15) // 16) * 16  # never larger than needed
    return max(16, min(target, rows_rounded))


def _ensure_two_blocks(blk, num_rows):
    """If the whole problem fits one grid step, split it in two so v7x's 2
    TensorCores can both run (dimension_semantics=('parallel',))."""
    if num_rows > 32 and (num_rows + blk - 1) // blk == 1:
        half = (num_rows + 1) // 2
        blk = max(16, ((half + 15) // 16) * 16)
    return blk


def _round_explicit_block_rows(block_rows):
    # Multiple of 16 keeps bf16 (16,128) vreg tiles unmasked; also fine for f32.
    return max(16, (int(block_rows) // 16) * 16)


# ----------------------------------------------------------------------------
# Public wrapper
# ----------------------------------------------------------------------------
def layer_norm(x: jax.Array, scale: jax.Array, shift: jax.Array,
               *, eps: float = _EPS, block_rows: int | None = None,
               vmem_limit_bytes: int | None = None) -> jax.Array:
    """LayerNorm over the last axis of x, matching the PyTorch module."""
    orig_shape = x.shape
    d_emb = orig_shape[-1]
    rows = math.prod(orig_shape[:-1]) if len(orig_shape) > 1 else 1

    out_dtype = x.dtype
    in_isz = jnp.dtype(x.dtype).itemsize
    out_isz = jnp.dtype(out_dtype).itemsize

    budget_bytes, auto_limit = _vmem_budgets()
    if vmem_limit_bytes is None:
        vmem_limit_bytes = auto_limit

    compiler_params = pltpu.CompilerParams(
        # Rows are independent -> let megacore / v7x's 2 TCs shard the grid.
        dimension_semantics=("parallel",),
        vmem_limit_bytes=vmem_limit_bytes,
    )

    # ------------------------------------------------------------------ #
    # Lane-dense packed path: ALWAYS used for d_emb < 128.  g = 128//d_pad
    # original rows are folded into the 128-wide lane axis (d_pad = next
    # pow2 >= d_emb); pad lanes/rows are masked out of gmat / sliced off.
    # ------------------------------------------------------------------ #
    if d_emb < _LANE:
        d_pad = 1 << max(0, (d_emb - 1).bit_length())   # next pow2 >= d_emb, divides 128
        g = _LANE // d_pad

        x2 = x.reshape(rows, d_emb)
        if d_pad != d_emb:
            x2 = jnp.pad(x2, ((0, 0), (0, d_pad - d_emb)))   # tiny extra HBM pass
        row_pad = (-rows) % g
        if row_pad:
            x2 = jnp.pad(x2, ((0, row_pad), (0, 0)))         # <= g-1 extra rows
        prows = (rows + row_pad) // g
        x2 = x2.reshape(prows, _LANE)

        scale1 = scale.reshape(-1)
        shift1 = shift.reshape(-1)
        if d_pad != d_emb:
            scale1 = jnp.pad(scale1, (0, d_pad - d_emb))
            shift1 = jnp.pad(shift1, (0, d_pad - d_emb))
        scale2 = jnp.tile(scale1, g).reshape(1, _LANE)
        shift2 = jnp.tile(shift1, g).reshape(1, _LANE)

        # Block-diagonal 0/1 matrix in bf16 (exact); pad lanes contribute 0.
        lane_idx = jnp.arange(_LANE)
        grp = lane_idx // d_pad
        valid = (lane_idx % d_pad) < d_emb
        gmat = ((grp[:, None] == grp[None, :]) & valid[:, None]).astype(jnp.bfloat16)

        # bf16 input => hi == x exactly, skip the lo MXU pass (static flag).
        skip_lo = jnp.dtype(x.dtype) == jnp.dtype(jnp.bfloat16)

        if block_rows is None:
            blk = _pick_block_rows(prows, _LANE, in_isz, out_isz, budget_bytes)
            blk = _ensure_two_blocks(blk, prows)
        else:
            blk = _round_explicit_block_rows(block_rows)
        grid = (pl.cdiv(prows, blk),)         # partial last block masked by Pallas

        n_dots = 2 if skip_lo else 4
        cost = pl.CostEstimate(
            flops=int(2 * prows * _LANE * _LANE * n_dots + 8 * prows * _LANE),
            transcendentals=int(prows * _LANE),
            bytes_accessed=int(prows * _LANE * (in_isz + out_isz)
                               + _LANE * _LANE * 2 + 4 * _LANE),
        )
        kernel = functools.partial(_layernorm_packed_kernel,
                                   d_emb=d_emb, eps=eps, skip_lo=skip_lo)
        out2 = pl.pallas_call(
            kernel,
            out_shape=jax.ShapeDtypeStruct((prows, _LANE), out_dtype),
            grid_spec=pltpu.PrefetchScalarGridSpec(
                num_scalar_prefetch=0,
                grid=grid,
                in_specs=[
                    pl.BlockSpec((blk, _LANE), lambda i: (i, 0)),
                    pl.BlockSpec((_LANE, _LANE), lambda i: (0, 0)),  # constant -> VMEM resident
                    pl.BlockSpec((1, _LANE), lambda i: (0, 0)),
                    pl.BlockSpec((1, _LANE), lambda i: (0, 0)),
                ],
                out_specs=pl.BlockSpec((blk, _LANE), lambda i: (i, 0)),
            ),
            compiler_params=compiler_params,
            cost_estimate=cost,
        )(x2, gmat, scale2, shift2)

        out2 = out2.reshape(prows * g, d_pad)
        if row_pad:
            out2 = out2[:rows]
        if d_pad != d_emb:
            out2 = out2[:, :d_emb]
        return out2.reshape(orig_shape)

    # ------------------------------------------------------------------ #
    # Standard path: lane axis = d_emb (>= 128).
    # ------------------------------------------------------------------ #
    x2 = x.reshape(rows, d_emb)
    scale2 = scale.reshape(1, d_emb)
    shift2 = shift.reshape(1, d_emb)

    if block_rows is None:
        blk = _pick_block_rows(rows, d_emb, in_isz, out_isz, budget_bytes)
        blk = _ensure_two_blocks(blk, rows)
    else:
        blk = _round_explicit_block_rows(block_rows)
    grid = (pl.cdiv(rows, blk),)              # no jnp.pad: partial block masked by Pallas

    kernel = functools.partial(_layernorm_kernel, eps=eps)
    cost = pl.CostEstimate(
        flops=int(8 * rows * d_emb),
        transcendentals=int(rows),
        bytes_accessed=int(rows * d_emb * (in_isz + out_isz) + 2 * d_emb * 4),
    )
    out2 = pl.pallas_call(
        kernel,
        out_shape=jax.ShapeDtypeStruct((rows, d_emb), out_dtype),
        grid_spec=pltpu.PrefetchScalarGridSpec(
            num_scalar_prefetch=0,
            grid=grid,
            in_specs=[
                pl.BlockSpec((blk, d_emb), lambda i: (i, 0)),
                pl.BlockSpec((1, d_emb), lambda i: (0, 0)),
                pl.BlockSpec((1, d_emb), lambda i: (0, 0)),
            ],
            out_specs=pl.BlockSpec((blk, d_emb), lambda i: (i, 0)),
        ),
        compiler_params=compiler_params,
        cost_estimate=cost,
    )(x2, scale2, shift2)
    return out2.reshape(orig_shape)


# ----------------------------------------------------------------------------
# Self-test
# ----------------------------------------------------------------------------
def _ref_layernorm(x, scale, shift, eps=_EPS):
    mean = jnp.mean(x, axis=-1, keepdims=True)
    var = jnp.mean((x - mean) ** 2, axis=-1, keepdims=True)  # unbiased=False
    return (x - mean) / jnp.sqrt(var + eps) * scale + shift


if __name__ == "__main__":
    key = jax.random.PRNGKey(0)

    # Primary demo shape (matches the module usage): batch=2, seq=8, d_emb=32.
    batch, seq, d_emb = 2, 8, 32
    x = jax.random.normal(key, (batch, seq, d_emb), dtype=jnp.float32)
    # Deterministic parameter init matching the module's __init__:
    scale = jnp.ones((d_emb,), dtype=jnp.float32)   # torch.nn.Parameter(torch.ones(d_emb))
    shift = jnp.zeros((d_emb,), dtype=jnp.float32)  # torch.nn.Parameter(torch.zeros(d_emb))

    out = layer_norm(x, scale, shift)
    jax.block_until_ready(out)
    assert out.shape == x.shape
    assert jnp.allclose(out, _ref_layernorm(x, scale, shift),
                        atol=1e-4, rtol=1e-4), "mismatch vs reference (packed path)"

    # Other code paths at small shapes:
    #   (2,8,128)  standard path (d_emb >= 128)
    #   (3,5,32)   packed path with row padding (rows % g != 0)
    #   (2,8,48)   packed path with lane padding (d_emb doesn't divide 128)
    #   (4,64,32)  packed path, auto split into >= 2 grid steps (2-TC sharding)
    for shape in [(2, 8, 128), (3, 5, 32), (2, 8, 48), (4, 64, 32)]:
        d = shape[-1]
        xb = jax.random.normal(jax.random.PRNGKey(1), shape, dtype=jnp.float32)
        sc = jax.random.normal(jax.random.PRNGKey(2), (d,), dtype=jnp.float32)
        sh = jax.random.normal(jax.random.PRNGKey(3), (d,), dtype=jnp.float32)
        ob = layer_norm(xb, sc, sh)
        jax.block_until_ready(ob)
        assert jnp.allclose(ob, _ref_layernorm(xb, sc, sh),
                            atol=1e-4, rtol=1e-4), f"mismatch vs reference at {shape}"

    # bf16 I/O exercises the single-MXU-pass (skip_lo) packed path.
    xb16 = jax.random.normal(jax.random.PRNGKey(4), (4, 16, 64)).astype(jnp.bfloat16)
    sc16 = jax.random.normal(jax.random.PRNGKey(5), (64,), dtype=jnp.float32)
    sh16 = jax.random.normal(jax.random.PRNGKey(6), (64,), dtype=jnp.float32)
    ob16 = layer_norm(xb16, sc16, sh16)
    jax.block_until_ready(ob16)
    assert ob16.dtype == jnp.bfloat16
    ref16 = _ref_layernorm(xb16.astype(jnp.float32), sc16, sh16)
    assert jnp.allclose(ob16.astype(jnp.float32), ref16,
                        atol=5e-2, rtol=5e-2), "mismatch vs reference (bf16 packed path)"

    print("KERNEL_OK")
</pallas_src>

<mosaic_0001>
module attributes {stable_mosaic.version = 11 : i64} {
  func.func @_layernorm_packed_kernel(%arg0: i32, %arg1: memref<16x128xf32, #tpu.memory_space<vmem>>, %arg2: memref<128x128xbf16, #tpu.memory_space<vmem>>, %arg3: memref<1x128xf32, #tpu.memory_space<vmem>>, %arg4: memref<1x128xf32, #tpu.memory_space<vmem>>, %arg5: memref<16x128xf32, #tpu.memory_space<vmem>>) attributes {dimension_semantics = [#tpu.dimension_semantics<parallel>], iteration_bounds = array<i64: 1>, scalar_prefetch = 0 : i64, scratch_operands = 0 : i64, tpu.core_type = #tpu.core_type<tc>, window_params = [{transform_indices = @transform_0, window_bounds = array<i64: 16, 128>}, {pipeline_mode = #tpu.pipeline_mode<synchronous>, transform_indices = @transform_1, window_bounds = array<i64: 128, 128>}, {pipeline_mode = #tpu.pipeline_mode<synchronous>, transform_indices = @transform_2, window_bounds = array<i64: 1, 128>}, {pipeline_mode = #tpu.pipeline_mode<synchronous>, transform_indices = @transform_3, window_bounds = array<i64: 1, 128>}, {transform_indices = @transform_4, window_bounds = array<i64: 16, 128>}]} {
    %c0 = arith.constant 0 : index
    %c0_0 = arith.constant 0 : index
    %0 = vector.load %arg1[%c0, %c0_0] : memref<16x128xf32, #tpu.memory_space<vmem>>, vector<16x128xf32>
    %c0_1 = arith.constant 0 : index
    %c0_2 = arith.constant 0 : index
    %1 = vector.load %arg2[%c0_1, %c0_2] : memref<128x128xbf16, #tpu.memory_space<vmem>>, vector<128x128xbf16>
    %2 = arith.truncf %0 : vector<16x128xf32> to vector<16x128xbf16>
    %cst = arith.constant dense<0.000000e+00> : vector<16x128xf32>
    %3 = tpu.matmul %2, %1, %cst {dimension_numbers = #tpu.dot_dimension_numbers<[1], [0], [0], [1], [0, 0, 1, 1], [], []>} : vector<16x128xbf16>, vector<128x128xbf16>, vector<16x128xf32> -> vector<16x128xf32>
    %4 = arith.extf %2 : vector<16x128xbf16> to vector<16x128xf32>
    %5 = arith.subf %0, %4 : vector<16x128xf32>
    %6 = arith.truncf %5 : vector<16x128xf32> to vector<16x128xbf16>
    %cst_3 = arith.constant dense<0.000000e+00> : vector<16x128xf32>
    %7 = tpu.matmul %6, %1, %cst_3 {dimension_numbers = #tpu.dot_dimension_numbers<[1], [0], [0], [1], [0, 0, 1, 1], [], []>} : vector<16x128xbf16>, vector<128x128xbf16>, vector<16x128xf32> -> vector<16x128xf32>
    %8 = arith.addf %3, %7 : vector<16x128xf32>
    %cst_4 = arith.constant 3.125000e-02 : f32
    %9 = vector.broadcast %cst_4 : f32 to vector<16x128xf32>
    %10 = arith.mulf %8, %9 : vector<16x128xf32>
    %11 = arith.subf %0, %10 : vector<16x128xf32>
    %12 = arith.mulf %11, %11 : vector<16x128xf32>
    %13 = arith.truncf %12 : vector<16x128xf32> to vector<16x128xbf16>
    %cst_5 = arith.constant dense<0.000000e+00> : vector<16x128xf32>
    %14 = tpu.matmul %13, %1, %cst_5 {dimension_numbers = #tpu.dot_dimension_numbers<[1], [0], [0], [1], [0, 0, 1, 1], [], []>} : vector<16x128xbf16>, vector<128x128xbf16>, vector<16x128xf32> -> vector<16x128xf32>
    %15 = arith.extf %13 : vector<16x128xbf16> to vector<16x128xf32>
    %16 = arith.subf %12, %15 : vector<16x128xf32>
    %17 = arith.truncf %16 : vector<16x128xf32> to vector<16x128xbf16>
    %cst_6 = arith.constant dense<0.000000e+00> : vector<16x128xf32>
    %18 = tpu.matmul %17, %1, %cst_6 {dimension_numbers = #tpu.dot_dimension_numbers<[1], [0], [0], [1], [0, 0, 1, 1], [], []>} : vector<16x128xbf16>, vector<128x128xbf16>, vector<16x128xf32> -> vector<16x128xf32>
    %19 = arith.addf %14, %18 : vector<16x128xf32>
    %cst_7 = arith.constant 3.125000e-02 : f32
    %20 = vector.broadcast %cst_7 : f32 to vector<16x128xf32>
    %21 = arith.mulf %19, %20 : vector<16x128xf32>
    %cst_8 = arith.constant 9.99999974E-6 : f32
    %22 = vector.broadcast %cst_8 : f32 to vector<16x128xf32>
    %23 = arith.addf %21, %22 : vector<16x128xf32>
    %24 = math.rsqrt %23 : vector<16x128xf32>
    %25 = arith.mulf %11, %24 : vector<16x128xf32>
    %c0_9 = arith.constant 0 : index
    %c0_10 = arith.constant 0 : index
    %26 = vector.load %arg3[%c0_9, %c0_10] : memref<1x128xf32, #tpu.memory_space<vmem>>, vector<1x128xf32>
    %27 = vector.broadcast %26 : vector<1x128xf32> to vector<16x128xf32>
    %28 = arith.mulf %25, %27 : vector<16x128xf32>
    %c0_11 = arith.constant 0 : index
    %c0_12 = arith.constant 0 : index
    %29 = vector.load %arg4[%c0_11, %c0_12] : memref<1x128xf32, #tpu.memory_space<vmem>>, vector<1x128xf32>
    %30 = vector.broadcast %29 : vector<1x128xf32> to vector<16x128xf32>
    %31 = arith.addf %28, %30 : vector<16x128xf32>
    %c0_13 = arith.constant 0 : index
    %c0_14 = arith.constant 0 : index
    %32 = vector.load %arg5[%c0_13, %c0_14] : memref<16x128xf32, #tpu.memory_space<vmem>>, vector<16x128xf32>
    tpu.vector_store %arg5[%c0_13, %c0_14], %31 {strides = array<i32>} : memref<16x128xf32, #tpu.memory_space<vmem>>, vector<16x128xf32>,
    return
  }
  func.func @transform_0(%arg0: i32) -> (i32, i32) {
    %c0_i32 = arith.constant 0 : i32
    %c0_i32_0 = arith.constant 0 : i32
    return %arg0, %c0_i32 : i32, i32
  }
  func.func @transform_1(%arg0: i32) -> (i32, i32) {
    %c0_i32 = arith.constant 0 : i32
    %c0_i32_0 = arith.constant 0 : i32
    %c0_i32_1 = arith.constant 0 : i32
    return %c0_i32, %c0_i32_0 : i32, i32
  }
  func.func @transform_2(%arg0: i32) -> (i32, i32) {
    %c0_i32 = arith.constant 0 : i32
    %c0_i32_0 = arith.constant 0 : i32
    %c0_i32_1 = arith.constant 0 : i32
    return %c0_i32, %c0_i32_0 : i32, i32
  }
  func.func @transform_3(%arg0: i32) -> (i32, i32) {
    %c0_i32 = arith.constant 0 : i32
    %c0_i32_0 = arith.constant 0 : i32
    %c0_i32_1 = arith.constant 0 : i32
    return %c0_i32, %c0_i32_0 : i32, i32
  }
  func.func @transform_4(%arg0: i32) -> (i32, i32) {
    %c0_i32 = arith.constant 0 : i32
    %c0_i32_0 = arith.constant 0 : i32
    return %arg0, %c0_i32 : i32, i32
  }
}

</mosaic_0001>

<llo_original>
// kernel: tpu_custom_call.1
$region0: #{tpu_custom_call.1}
  #allocation0 [shape = 'u32[]', space=smem, size = 0x4, offset = 0x4, fixed_abs, tag = 'smem constant byte address 0x4 - core index']
  #allocation1 [shape = 'u32[72,128]{1,0:T(1,128)}', space=vmem, size = 0x9000, scoped, tag = 'internal scratch']
  %s0 = inlined_call_operand.hbm [shape: f32[4,128], index: 0, kind: input, shape index: {}]
  %s1 = inlined_call_operand.hbm [shape: bf16[128,128], index: 1, kind: input, shape index: {}]
  %s2 = inlined_call_operand.vmem [shape: f32[1,128], index: 2, kind: input, shape index: {}]
  %s3 = inlined_call_operand.vmem [shape: f32[1,128], index: 3, kind: input, shape index: {}]
  %s4 = inlined_call_operand.hbm [shape: f32[4,128], index: 4, kind: output, shape index: {}]
  %s5 = sld [smem:[#allocation0]]
  $region34: #{tpu_custom_call.1} parent=0
    _
  %s7 = ssub.s32 1, %s5
  %s8 = scalar_select 0, %s7, %s5
  $region1: #{tpu_custom_call.1} parent=0
    #allocation2 [shape = 'u8[8192]{0}', space=vmem, size = 0x2000, scoped, tag = 'input window, operand 0, single buffered']
    #allocation3 [shape = 's32[1]{0}', space=sflag, size = 0x4, scoped, tag = 'scoped memory for tpu_custom_call.1']
    #allocation4 [shape = 's32[1]{0}', space=sflag, size = 0x4, scoped, tag = 'scoped memory for tpu_custom_call.1']
    #allocation5 [shape = 'u8[32768]{0}', space=vmem, size = 0x8000, scoped, tag = 'input window, operand 1, single buffered']
    #allocation6 [shape = 's32[1]{0}', space=sflag, size = 0x4, scoped, tag = 'scoped memory for tpu_custom_call.1']
    #allocation7 [shape = 'u8[8192]{0}', space=vmem, size = 0x2000, scoped, tag = 'output window, operand 0, single buffered']
    %9 = vsyncpa [#allocation3], 0
    %10 = vsyncpa [#allocation6], 0
    %11 = vsyncpa [#allocation4], 0
    // Predicated region
    $region2: #{tpu_custom_call.1} parent=1 // pred_check
      _
    $region3: #{tpu_custom_call.1} parent=1 // pred_check_branch
      %13 = sbr.rel (0) target = $region5
    $region4: #{tpu_custom_call.1} parent=1 // pred_region
      %15 = vsyncadd [#allocation3], 192
      %s16 = sshll.u32 %s0, 4
      %s17 = int_to_ptr.hbm [resolvable:$true] %s16
      %s18 = sshll.u32 [#allocation2], 4
      %s19 = int_to_ptr.vmem [resolvable:$true] %s18
      %24 = dma.hbm_to_vmem [thread:$0]  %s17, 64, %s19, [#allocation3], 64, 64, 4
    $region5: #{tpu_custom_call.1} parent=1 // pred_fallthru
      _
    // Predicated region
    $region6: #{tpu_custom_call.1} parent=1 // pred_check
      _
    $region7: #{tpu_custom_call.1} parent=1 // pred_check_branch
      %26 = sbr.rel (0) target = $region9
    $region8: #{tpu_custom_call.1} parent=1 // pred_region
      %28 = vsyncadd [#allocation6], 0
      %s29 = sshll.u32 %s1, 4
      %s30 = int_to_ptr.hbm [resolvable:$true] %s29
      %s31 = sshll.u32 [#allocation5], 4
      %s32 = int_to_ptr.vmem [resolvable:$true] %s31
      %37 = dma.hbm_to_vmem [thread:$0]  %s30, 1024, %s32, [#allocation6], 64, 64, 4
    $region9: #{tpu_custom_call.1} parent=1 // pred_fallthru
      _
    // Predicated region
    $region10: #{tpu_custom_call.1} parent=1 // pred_check
      _
    $region11: #{tpu_custom_call.1} parent=1 // pred_check_branch
      %39 = sbr.rel (0) target = $region13
    $region12: #{tpu_custom_call.1} parent=1 // pred_region
      _
    $region13: #{tpu_custom_call.1} parent=1 // pred_fallthru
      _
    // Predicated region
    $region14: #{tpu_custom_call.1} parent=1 // pred_check
      _
    $region15: #{tpu_custom_call.1} parent=1 // pred_check_branch
      %41 = sbr.rel (0) target = $region17
    $region16: #{tpu_custom_call.1} parent=1 // pred_region
      _
    $region17: #{tpu_custom_call.1} parent=1 // pred_fallthru
      _
    // Predicated region
    $region18: #{tpu_custom_call.1} parent=1 // pred_check
      _
    $region19: #{tpu_custom_call.1} parent=1 // pred_check_branch
      %43 = sbr.rel (0) target = $region21
    $region20: #{tpu_custom_call.1} parent=1 // pred_region
      %45 = dma.done [#allocation3], 256
    $region21: #{tpu_custom_call.1} parent=1 // pred_fallthru
      _
    // Predicated region
    $region22: #{tpu_custom_call.1} parent=1 // pred_check
      _
    $region23: #{tpu_custom_call.1} parent=1 // pred_check_branch
      %47 = sbr.rel (0) target = $region25
    $region24: #{tpu_custom_call.1} parent=1 // pred_region
      %49 = dma.done [#allocation6], 1024
    $region25: #{tpu_custom_call.1} parent=1 // pred_fallthru
      _
    %v50 = vld [vmem:[#allocation2] sm:$0xff]
    %v51 = vld [vmem:[#allocation2 + $0x8] sm:$0xff]
    %v52 = vld [vmem:[#allocation5] sm:$0xf]
    %v53 = vld [vmem:[#allocation5 + $0x4] sm:$0xf]
    %v54 = vld [vmem:[#allocation5 + $0x8] sm:$0xf]
    %v55 = vld [vmem:[#allocation5 + $0xc] sm:$0xf]
    %v56 = vld [vmem:[#allocation5 + $0x10] sm:$0xf]
    %v57 = vld [vmem:[#allocation5 + $0x14] sm:$0xf]
    %v58 = vld [vmem:[#allocation5 + $0x18] sm:$0xf]
    %v59 = vld [vmem:[#allocation5 + $0x1c] sm:$0xf]
    %v60 = vld [vmem:[#allocation5 + $0x20] sm:$0xf]
    %v61 = vld [vmem:[#allocation5 + $0x24] sm:$0xf]
    %v62 = vld [vmem:[#allocation5 + $0x28] sm:$0xf]
    %v63 = vld [vmem:[#allocation5 + $0x2c] sm:$0xf]
    %v64 = vld [vmem:[#allocation5 + $0x30] sm:$0xf]
    %v65 = vld [vmem:[#allocation5 + $0x34] sm:$0xf]
    %v66 = vld [vmem:[#allocation5 + $0x38] sm:$0xf]
    %v67 = vld [vmem:[#allocation5 + $0x3c] sm:$0xf]
    %v68 = vpack.c.bf16 %v50, %v50
    %v69 = vpack.c.bf16 %v51, %v51
    %v70 = vunpack.c.l.bf16 %v68
    %v71 = vunpack.c.l.bf16 %v69
    %v72 = vsub.f32 %v50, %v70
    %v73 = vsub.f32 %v51, %v71
    %v74 = vpack.c.bf16 %v73, %v72
    %v91 = vunpack.c.l.b16 %v52
    %v92 = vunpack.c.l.b16 %v53
    %v93 = vunpack.c.l.b16 %v54
    %v94 = vunpack.c.l.b16 %v55
    %v95 = vunpack.c.l.b16 %v56
    %v96 = vunpack.c.l.b16 %v57
    %v97 = vunpack.c.l.b16 %v58
    %v98 = vunpack.c.l.b16 %v59
    %v99 = vunpack.c.l.b16 %v60
    %v100 = vunpack.c.l.b16 %v61
    %v101 = vunpack.c.l.b16 %v62
    %v102 = vunpack.c.l.b16 %v63
    %v103 = vunpack.c.l.b16 %v64
    %v104 = vunpack.c.l.b16 %v65
    %v105 = vunpack.c.l.b16 %v66
    %v106 = vunpack.c.l.b16 %v67
    %v107 = vpack.c.b16 %v92, %v91
    %v108 = vpack.c.b16 %v94, %v93
    %v109 = vpack.c.b16 %v96, %v95
    %v110 = vpack.c.b16 %v98, %v97
    %v111 = vpack.c.b16 %v100, %v99
    %v112 = vpack.c.b16 %v102, %v101
    %v113 = vpack.c.b16 %v104, %v103
    %v114 = vpack.c.b16 %v106, %v105
    %123 = vmatpush.bf16.msra.mxu0 %v114
    %124 = vmatpush.bf16.msra.mxu0 %v113
    %125 = vmatpush.bf16.msra.mxu0 %v112
    %126 = vmatpush.bf16.msra.mxu0 %v111
    %127 = vmatpush.bf16.msra.mxu0 %v110
    %128 = vmatpush.bf16.msra.mxu0 %v109
    %129 = vmatpush.bf16.msra.mxu0 %v108
    %130 = vmatpush.bf16.msra.mxu0 %v107
    %131 = vmatmul.bf16.gmra.mxu0 %v74
    %v132 = vpop.f32.mrf.mxu0
    %v133 = vadd.f32 0.0, %v132
    %v134 = vpop.f32.mrf.mxu0
    %v135 = vadd.f32 0.0, %v134
    %136 = vdwg.mxu0
    %v139 = vunpack.c.l.b16 %v68
    %v140 = vunpack.c.l.b16 %v69
    %v141 = vpack.c.b16 %v140, %v139
    %143 = vmatpush.bf16.msra.mxu0 %v114
    %144 = vmatpush.bf16.msra.mxu0 %v113
    %145 = vmatpush.bf16.msra.mxu0 %v112
    %146 = vmatpush.bf16.msra.mxu0 %v111
    %147 = vmatpush.bf16.msra.mxu0 %v110
    %148 = vmatpush.bf16.msra.mxu0 %v109
    %149 = vmatpush.bf16.msra.mxu0 %v108
    %150 = vmatpush.bf16.msra.mxu0 %v107
    %151 = vmatmul.bf16.gmra.mxu0 %v141
    %v152 = vpop.f32.mrf.mxu0
    %v153 = vadd.f32 %v133, %v152
    %v154 = vpop.f32.mrf.mxu0
    %v155 = vadd.f32 %v135, %v154
    %156 = vdwg.mxu0
    %v157 = vmul.f32 %v153, 0.03125
    %v158 = vmul.f32 %v155, 0.03125
    %v159 = vsub.f32 %v50, %v157
    %v160 = vsub.f32 %v51, %v158
    %v161 = vmul.f32 %v159, %v159
    %v162 = vmul.f32 %v160, %v160
    %v163 = vpack.c.bf16 %v161, %v161
    %v164 = vpack.c.bf16 %v162, %v162
    %v165 = vunpack.c.l.bf16 %v163
    %v166 = vunpack.c.l.bf16 %v164
    %v167 = vsub.f32 %v161, %v165
    %v168 = vsub.f32 %v162, %v166
    %v169 = vpack.c.bf16 %v168, %v167
    %170 = vmatpush.bf16.msra.mxu0 %v114
    %171 = vmatpush.bf16.msra.mxu0 %v113
    %172 = vmatpush.bf16.msra.mxu0 %v112
    %173 = vmatpush.bf16.msra.mxu0 %v111
    %174 = vmatpush.bf16.msra.mxu0 %v110
    %175 = vmatpush.bf16.msra.mxu0 %v109
    %176 = vmatpush.bf16.msra.mxu0 %v108
    %177 = vmatpush.bf16.msra.mxu0 %v107
    %178 = vmatmul.bf16.gmra.mxu0 %v169
    %v179 = vpop.f32.mrf.mxu0
    %v180 = vadd.f32 0.0, %v179
    %v181 = vpop.f32.mrf.mxu0
    %v182 = vadd.f32 0.0, %v181
    %183 = vdwg.mxu0
    %v186 = vunpack.c.l.b16 %v163
    %v187 = vunpack.c.l.b16 %v164
    %v188 = vpack.c.b16 %v187, %v186
    %190 = vmatpush.bf16.msra.mxu0 %v114
    %191 = vmatpush.bf16.msra.mxu0 %v113
    %192 = vmatpush.bf16.msra.mxu0 %v112
    %193 = vmatpush.bf16.msra.mxu0 %v111
    %194 = vmatpush.bf16.msra.mxu0 %v110
    %195 = vmatpush.bf16.msra.mxu0 %v109
    %196 = vmatpush.bf16.msra.mxu0 %v108
    %197 = vmatpush.bf16.msra.mxu0 %v107
    %198 = vmatmul.bf16.gmra.mxu0 %v188
    %v199 = vpop.f32.mrf.mxu0
    %v200 = vadd.f32 %v180, %v199
    %v201 = vpop.f32.mrf.mxu0
    %v202 = vadd.f32 %v182, %v201
    %203 = vdwg.mxu0
    %v204 = vmul.f32 %v200, 0.03125
    %v205 = vmul.f32 %v202, 0.03125
    %v206 = vadd.f32 %v204, 1e-05
    %v207 = vadd.f32 %v205, 1e-05
    %v208 = vrsqrt.pop %v206
    %v209 = vmul.f32 %v208, %v206
    %v210 = vmul.f32 %v209, %v208
    %v211 = vmul.f32 0.5, %v210
    %v212 = vsub.f32 1.5, %v211
    %v213 = vmul.f32 %v208, %v212
    %vm214 = vweird.f32 %v206
    %vm215 = vweird.f32 %v208
    %vm216 = vmor %vm214, %vm215
    %v217 = vsel %vm216, %v208, %v213
    %v218 = vrsqrt.pop %v207
    %v219 = vmul.f32 %v218, %v207
    %v220 = vmul.f32 %v219, %v218
    %v221 = vmul.f32 0.5, %v220
    %v222 = vsub.f32 1.5, %v221
    %v223 = vmul.f32 %v218, %v222
    %vm224 = vweird.f32 %v207
    %vm225 = vweird.f32 %v218
    %vm226 = vmor %vm224, %vm225
    %v227 = vsel %vm226, %v218, %v223
    %v228 = vmul.f32 %v159, %v217
    %v229 = vmul.f32 %v160, %v227
    %v230 = vld [vmem:[%s2] sm:$0x1]
    %v232 = vperm.slane %v230, 0
    %v234 = vmul.f32 %v228, %v232
    %v235 = vmul.f32 %v229, %v232
    %v236 = vld [vmem:[%s3] sm:$0x1]
    %v238 = vperm.slane %v236, 0
    %v240 = vadd.f32 %v234, %v238
    %v241 = vadd.f32 %v235, %v238
    %242 = vst [vmem:[#allocation7] sm:$0xff] %v240
    %243 = vst [vmem:[#allocation7 + $0x8] sm:$0xff] %v241
    // Predicated region
    $region26: #{tpu_custom_call.1} parent=1 // pred_check
      _
    $region27: #{tpu_custom_call.1} parent=1 // pred_check_branch
      %245 = sbr.rel (0) target = $region29
    $region28: #{tpu_custom_call.1} parent=1 // pred_region
      %247 = vsyncadd [#allocation4], 192
      %s248 = sshll.u32 [#allocation7], 4
      %s249 = int_to_ptr.vmem [resolvable:$true] %s248
      %s250 = sshll.u32 %s4, 4
      %s251 = int_to_ptr.hbm [resolvable:$true] %s250
      %256 = dma.vmem_to_hbm [thread:$0]  %s249, 64, %s251, [#allocation4], 64, 64, 4
    $region29: #{tpu_custom_call.1} parent=1 // pred_fallthru
      _
    // Predicated region
    $region30: #{tpu_custom_call.1} parent=1 // pred_check
      _
    $region31: #{tpu_custom_call.1} parent=1 // pred_check_branch
      %258 = sbr.rel (0) target = $region33
    $region32: #{tpu_custom_call.1} parent=1 // pred_region
      %260 = dma.done [#allocation4], 256
    $region33: #{tpu_custom_call.1} parent=1 // pred_fallthru
      _
    %261 = vsyncpa [#allocation3], 1
    %262 = vsyncpa [#allocation6], 1
    %263 = vsyncpa [#allocation4], 1

</llo_original>
